<compile_context>
chip_gen: v6e
topology: v6e:2x2x1
jax: 0.10.0
libtpu: 0.0.40
codegen_flags: <defaults>
</compile_context>

<pallas_src>
import numpy as np
import jax
import jax.numpy as jnp
from jax.experimental import pallas as pl
from jax.experimental.pallas import tpu as pltpu


def conv2d_pallas(x, weight, bias, *, stride=2, padding=1):
    """Conv2d (NCHW) fused into a single Pallas call.

    features[n,co,ho,wo] = b[co] + sum_{c,kh,kw} W[co,c,kh,kw] *
                           x[n,c, stride*ho+kh-pad, stride*wo+kw-pad]

    is computed as, per (n, kh):
        zk  = x_n(H, C_in*W)      @ cw[kh](C_in*W, C_out*W_out)   # W-taps + weight
        acc += r[kh](H_out, H)    @ zk                            # H-taps (stride/pad)
    with cw/r built from the conv weight + 0/1 selections (padding folded in).
    """
    N, C_in, H, W = x.shape
    C_out, _, KH, KW = weight.shape
    H_out = (H + 2 * padding - KH) // stride + 1
    W_out = (W + 2 * padding - KW) // stride + 1
    M_cols = C_out * W_out

    x = x.astype(jnp.float32)
    weight = weight.astype(jnp.float32)
    bias = bias.astype(jnp.float32)

    # ---- trace-time (numpy) 0/1 tap-selection matrices; padding folded in ----
    # S[w, kw, wo] = 1  iff  w == stride*wo + kw - padding   (only valid 0<=w<W)
    w_i = np.arange(W)[:, None, None]
    kw_i = np.arange(KW)[None, :, None]
    wo_i = np.arange(W_out)[None, None, :]
    S = (w_i == stride * wo_i + kw_i - padding).astype(np.float32)      # (W, KW, W_out)

    # R[kh, ho, h] = 1  iff  h == stride*ho + kh - padding   (only valid 0<=h<H)
    kh_i = np.arange(KH)[:, None, None]
    ho_i = np.arange(H_out)[None, :, None]
    h_i = np.arange(H)[None, None, :]
    R = (h_i == stride * ho_i + kh_i - padding).astype(np.float32)      # (KH, H_out, H)
    r_sel = jnp.asarray(R)

    # Fold conv weight + W-axis tap selection (and W padding) into one matrix
    # per kh:  cw[kh, (c,w), (co,wo)] = sum_kw weight[co,c,kh,kw] * S[w,kw,wo].
    # Weight-derived and tiny (KH*C_in*W*C_out*W_out floats, independent of
    # batch/spatial data); static across calls in a real model, so this
    # wrapper einsum would be hoisted / constant-folded.
    cw = jnp.einsum("ocab,wbv->acwov", weight, jnp.asarray(S))
    cw = cw.reshape(KH, C_in * W, M_cols)

    b_row = jnp.repeat(bias, W_out).reshape(1, M_cols)                  # (co, wo) order

    # Activation-side wrapper work is just this one tiny transpose/reshape
    # (replaces the old pad + 9 strided slices + stack + patches HBM round-trip).
    x3 = x.transpose(0, 2, 1, 3).reshape(N, H, C_in * W)                # rows (n,h), cols (c,w)

    def kernel(x_ref, cw_ref, r_ref, b_ref, o_ref):
        # x_ref : (N, H, C_in*W)              VMEM
        # cw_ref: (KH, C_in*W, C_out*W_out)   VMEM
        # r_ref : (KH, H_out, H)              VMEM
        # b_ref : (1, C_out*W_out)            VMEM
        # o_ref : (N, H_out, C_out*W_out)     VMEM
        cw_k = [cw_ref[k] for k in range(KH)]   # hoisted loads (static leading-dim index)
        r_k = [r_ref[k] for k in range(KH)]
        b = b_ref[...]
        for n in range(N):                      # static unroll; N is tiny
            xn = x_ref[n]                       # (H, C_in*W)
            acc = jnp.zeros((H_out, M_cols), jnp.float32)
            for k in range(KH):                 # static unroll; KH == 3
                zk = jnp.dot(xn, cw_k[k], preferred_element_type=jnp.float32)
                acc = acc + jnp.dot(r_k[k], zk, preferred_element_type=jnp.float32)
            o_ref[n] = (acc + b).astype(o_ref.dtype)

    flops = (N * KH * 2 * (H * (C_in * W) * M_cols + H_out * H * M_cols)
             + N * H_out * M_cols)
    bytes_accessed = 4 * (N * H * C_in * W + KH * C_in * W * M_cols
                          + KH * H_out * H + M_cols + N * H_out * M_cols)

    vmem = pl.BlockSpec(memory_space=pltpu.MemorySpace.VMEM)
    out = pl.pallas_call(
        kernel,
        out_shape=jax.ShapeDtypeStruct((N, H_out, M_cols), jnp.float32),
        in_specs=[vmem, vmem, vmem, vmem],
        out_specs=vmem,
        cost_estimate=pl.CostEstimate(flops=flops, transcendentals=0,
                                      bytes_accessed=bytes_accessed),
    )(x3, cw, r_sel, b_row)

    # TODO(synk): for scaled-up H*W / C_out, tile the (co, wo) lane axis with a
    # real grid (and bf16 operands on v6e/v7x) instead of the dense
    # weight-folded selection; at the module's (1,2,9,12) shape one step wins.
    # (N, H_out, C_out*W_out) -> NCHW with one tiny reshape + transpose.
    return out.reshape(N, H_out, C_out, W_out).transpose(0, 2, 1, 3)


def model_forward(x, weight, bias):
    """Equivalent of Model.forward: returns (identity, features)."""
    identity = x
    features = conv2d_pallas(x, weight, bias, stride=2, padding=1)
    return identity, features


if __name__ == "__main__":
    key = jax.random.PRNGKey(0)
    k_x, k_w, k_b = jax.random.split(key, 3)

    # Conv2d(2, 8, 3, stride=2, padding=1) parameters, deterministic init.
    C_in, C_out, KH, KW = 2, 8, 3, 3
    fan_in = C_in * KH * KW
    bound = 1.0 / (fan_in ** 0.5)
    weight = jax.random.uniform(k_w, (C_out, C_in, KH, KW), jnp.float32, -bound, bound)
    bias = jax.random.uniform(k_b, (C_out,), jnp.float32, -bound, bound)

    # Input shape from the module: (1, 2, 9, 12)
    x = jax.random.normal(k_x, (1, 2, 9, 12), dtype=jnp.float32)

    identity, features = model_forward(x, weight, bias)
    identity = jax.block_until_ready(identity)
    features = jax.block_until_ready(features)

    ref = jax.lax.conv_general_dilated(
        x, weight, window_strides=(2, 2), padding=((1, 1), (1, 1)),
        dimension_numbers=("NCHW", "OIHW", "NCHW"),
    ) + bias.reshape(1, C_out, 1, 1)

    assert identity.shape == (1, 2, 9, 12)
    assert features.shape == (1, 8, 5, 6)
    assert bool(jnp.allclose(identity, x))
    assert bool(jnp.allclose(features, ref, atol=1e-4, rtol=1e-4))

    # Batch > 1 exercises the in-kernel (statically unrolled) batch loop.
    x4 = jax.random.normal(jax.random.PRNGKey(1), (4, 2, 9, 12), dtype=jnp.float32)
    feat4 = jax.block_until_ready(conv2d_pallas(x4, weight, bias))
    ref4 = jax.lax.conv_general_dilated(
        x4, weight, window_strides=(2, 2), padding=((1, 1), (1, 1)),
        dimension_numbers=("NCHW", "OIHW", "NCHW"),
    ) + bias.reshape(1, C_out, 1, 1)
    assert feat4.shape == (4, 8, 5, 6)
    assert bool(jnp.allclose(feat4, ref4, atol=1e-4, rtol=1e-4))

    print("KERNEL_OK")
</pallas_src>

<mosaic_0001>
module attributes {stable_mosaic.version = 11 : i64} {
  func.func @kernel(%arg0: memref<1x9x24xf32, #tpu.memory_space<vmem>>, %arg1: memref<3x24x48xf32, #tpu.memory_space<vmem>>, %arg2: memref<3x5x9xf32, #tpu.memory_space<vmem>>, %arg3: memref<1x48xf32, #tpu.memory_space<vmem>>, %arg4: memref<1x5x48xf32, #tpu.memory_space<vmem>>) attributes {dimension_semantics = [], scalar_prefetch = 0 : i64, scratch_operands = 0 : i64, tpu.core_type = #tpu.core_type<tc>} {
    %c0 = arith.constant 0 : index
    %c0_0 = arith.constant 0 : index
    %c0_1 = arith.constant 0 : index
    %0 = vector.load %arg1[%c0, %c0_0, %c0_1] : memref<3x24x48xf32, #tpu.memory_space<vmem>>, vector<1x24x48xf32>
    %1 = vector.shape_cast %0 : vector<1x24x48xf32> to vector<24x48xf32>
    %c1 = arith.constant 1 : index
    %c0_2 = arith.constant 0 : index
    %c0_3 = arith.constant 0 : index
    %2 = vector.load %arg1[%c1, %c0_2, %c0_3] : memref<3x24x48xf32, #tpu.memory_space<vmem>>, vector<1x24x48xf32>
    %3 = vector.shape_cast %2 : vector<1x24x48xf32> to vector<24x48xf32>
    %c2 = arith.constant 2 : index
    %c0_4 = arith.constant 0 : index
    %c0_5 = arith.constant 0 : index
    %4 = vector.load %arg1[%c2, %c0_4, %c0_5] : memref<3x24x48xf32, #tpu.memory_space<vmem>>, vector<1x24x48xf32>
    %5 = vector.shape_cast %4 : vector<1x24x48xf32> to vector<24x48xf32>
    %c0_6 = arith.constant 0 : index
    %c0_7 = arith.constant 0 : index
    %c0_8 = arith.constant 0 : index
    %6 = vector.load %arg2[%c0_6, %c0_7, %c0_8] : memref<3x5x9xf32, #tpu.memory_space<vmem>>, vector<1x5x9xf32>
    %7 = vector.shape_cast %6 : vector<1x5x9xf32> to vector<5x9xf32>
    %c1_9 = arith.constant 1 : index
    %c0_10 = arith.constant 0 : index
    %c0_11 = arith.constant 0 : index
    %8 = vector.load %arg2[%c1_9, %c0_10, %c0_11] : memref<3x5x9xf32, #tpu.memory_space<vmem>>, vector<1x5x9xf32>
    %9 = vector.shape_cast %8 : vector<1x5x9xf32> to vector<5x9xf32>
    %c2_12 = arith.constant 2 : index
    %c0_13 = arith.constant 0 : index
    %c0_14 = arith.constant 0 : index
    %10 = vector.load %arg2[%c2_12, %c0_13, %c0_14] : memref<3x5x9xf32, #tpu.memory_space<vmem>>, vector<1x5x9xf32>
    %11 = vector.shape_cast %10 : vector<1x5x9xf32> to vector<5x9xf32>
    %c0_15 = arith.constant 0 : index
    %c0_16 = arith.constant 0 : index
    %12 = vector.load %arg3[%c0_15, %c0_16] : memref<1x48xf32, #tpu.memory_space<vmem>>, vector<1x48xf32>
    %c0_17 = arith.constant 0 : index
    %c0_18 = arith.constant 0 : index
    %c0_19 = arith.constant 0 : index
    %13 = vector.load %arg0[%c0_17, %c0_18, %c0_19] : memref<1x9x24xf32, #tpu.memory_space<vmem>>, vector<1x9x24xf32>
    %14 = vector.shape_cast %13 : vector<1x9x24xf32> to vector<9x24xf32>
    %cst = arith.constant 0.000000e+00 : f32
    %15 = vector.broadcast %cst : f32 to vector<5x48xf32>
    %cst_20 = arith.constant dense<0.000000e+00> : vector<9x48xf32>
    %16 = tpu.matmul %14, %1, %cst_20 {dimension_numbers = #tpu.dot_dimension_numbers<[1], [0], [0], [1], [0, 0, 1, 1], [], []>} : vector<9x24xf32>, vector<24x48xf32>, vector<9x48xf32> -> vector<9x48xf32>
    %cst_21 = arith.constant dense<0.000000e+00> : vector<5x48xf32>
    %17 = tpu.matmul %7, %16, %cst_21 {dimension_numbers = #tpu.dot_dimension_numbers<[1], [0], [0], [1], [0, 0, 1, 1], [], []>} : vector<5x9xf32>, vector<9x48xf32>, vector<5x48xf32> -> vector<5x48xf32>
    %18 = arith.addf %15, %17 : vector<5x48xf32>
    %cst_22 = arith.constant dense<0.000000e+00> : vector<9x48xf32>
    %19 = tpu.matmul %14, %3, %cst_22 {dimension_numbers = #tpu.dot_dimension_numbers<[1], [0], [0], [1], [0, 0, 1, 1], [], []>} : vector<9x24xf32>, vector<24x48xf32>, vector<9x48xf32> -> vector<9x48xf32>
    %cst_23 = arith.constant dense<0.000000e+00> : vector<5x48xf32>
    %20 = tpu.matmul %9, %19, %cst_23 {dimension_numbers = #tpu.dot_dimension_numbers<[1], [0], [0], [1], [0, 0, 1, 1], [], []>} : vector<5x9xf32>, vector<9x48xf32>, vector<5x48xf32> -> vector<5x48xf32>
    %21 = arith.addf %18, %20 : vector<5x48xf32>
    %cst_24 = arith.constant dense<0.000000e+00> : vector<9x48xf32>
    %22 = tpu.matmul %14, %5, %cst_24 {dimension_numbers = #tpu.dot_dimension_numbers<[1], [0], [0], [1], [0, 0, 1, 1], [], []>} : vector<9x24xf32>, vector<24x48xf32>, vector<9x48xf32> -> vector<9x48xf32>
    %cst_25 = arith.constant dense<0.000000e+00> : vector<5x48xf32>
    %23 = tpu.matmul %11, %22, %cst_25 {dimension_numbers = #tpu.dot_dimension_numbers<[1], [0], [0], [1], [0, 0, 1, 1], [], []>} : vector<5x9xf32>, vector<9x48xf32>, vector<5x48xf32> -> vector<5x48xf32>
    %24 = arith.addf %21, %23 : vector<5x48xf32>
    %25 = vector.broadcast %12 : vector<1x48xf32> to vector<5x48xf32>
    %26 = arith.addf %24, %25 : vector<5x48xf32>
    %c0_26 = arith.constant 0 : index
    %c0_27 = arith.constant 0 : index
    %c0_28 = arith.constant 0 : index
    %27 = vector.load %arg4[%c0_26, %c0_27, %c0_28] : memref<1x5x48xf32, #tpu.memory_space<vmem>>, vector<1x5x48xf32>
    %28 = vector.shape_cast %27 : vector<1x5x48xf32> to vector<5x48xf32>
    %29 = vector.shape_cast %26 : vector<5x48xf32> to vector<1x5x48xf32>
    tpu.vector_store %arg4[%c0_26, %c0_27, %c0_28], %29 {strides = array<i32>} : memref<1x5x48xf32, #tpu.memory_space<vmem>>, vector<1x5x48xf32>,
    return
  }
}

</mosaic_0001>

<llo_original>
// kernel: tpu_custom_call.1
$region0: #{tpu_custom_call.1}
  #allocation0 [shape = 'u32[]', space=smem, size = 0x4, offset = 0x4, fixed_abs, tag = 'smem constant byte address 0x4 - core index']
  #allocation1 [shape = 'u32[144,128]{1,0:T(1,128)}', space=vmem, size = 0x12000, scoped, tag = 'internal scratch']
  %s0 = inlined_call_operand.vmem [shape: f32[1,9,24], index: 0, kind: input, shape index: {}]
  %s1 = inlined_call_operand.hbm [shape: f32[3,24,48], index: 1, kind: input, shape index: {}]
  %s2 = inlined_call_operand.vmem [shape: f32[3,5,9], index: 2, kind: input, shape index: {}]
  %s3 = inlined_call_operand.vmem [shape: f32[1,48], index: 3, kind: input, shape index: {}]
  %s4 = inlined_call_operand.vmem [shape: f32[1,5,48], index: 4, kind: output, shape index: {}]
  %s5 = sld [smem:[#allocation0]]
  $region30: #{tpu_custom_call.1} parent=0
    _
  %s7 = ssub.s32 1, %s5
  %s8 = scalar_select 0, %s7, %s5
  $region1: #{tpu_custom_call.1} parent=0
    #allocation2 [shape = 'u8[36864]{0}', space=vmem, size = 0x9000, scoped, tag = 'input window, operand 1, single buffered']
    #allocation3 [shape = 's32[1]{0}', space=sflag, size = 0x4, scoped, tag = 'scoped memory for tpu_custom_call.1']
    %9 = vsyncpa [#allocation3], 0
    // Predicated region
    $region2: #{tpu_custom_call.1} parent=1 // pred_check
      _
    $region3: #{tpu_custom_call.1} parent=1 // pred_check_branch
      %11 = sbr.rel (0) target = $region5
    $region4: #{tpu_custom_call.1} parent=1 // pred_region
      _
    $region5: #{tpu_custom_call.1} parent=1 // pred_fallthru
      _
    // Predicated region
    $region6: #{tpu_custom_call.1} parent=1 // pred_check
      _
    $region7: #{tpu_custom_call.1} parent=1 // pred_check_branch
      %13 = sbr.rel (0) target = $region9
    $region8: #{tpu_custom_call.1} parent=1 // pred_region
      %s15 = ssub.s32 1152, 1152
      %16 = vsyncadd [#allocation3], %s15
      %s17 = sshll.u32 [#allocation2], 4
      %s18 = int_to_ptr.vmem [resolvable:$true] %s17
      %23 = dma.hbm_to_vmem [thread:$0]  %s1, 1152, %s18, [#allocation3], 128, 128, 8
    $region9: #{tpu_custom_call.1} parent=1 // pred_fallthru
      _
    // Predicated region
    $region10: #{tpu_custom_call.1} parent=1 // pred_check
      _
    $region11: #{tpu_custom_call.1} parent=1 // pred_check_branch
      %25 = sbr.rel (0) target = $region13
    $region12: #{tpu_custom_call.1} parent=1 // pred_region
      _
    $region13: #{tpu_custom_call.1} parent=1 // pred_fallthru
      _
    // Predicated region
    $region14: #{tpu_custom_call.1} parent=1 // pred_check
      _
    $region15: #{tpu_custom_call.1} parent=1 // pred_check_branch
      %27 = sbr.rel (0) target = $region17
    $region16: #{tpu_custom_call.1} parent=1 // pred_region
      _
    $region17: #{tpu_custom_call.1} parent=1 // pred_fallthru
      _
    // Predicated region
    $region18: #{tpu_custom_call.1} parent=1 // pred_check
      _
    $region19: #{tpu_custom_call.1} parent=1 // pred_check_branch
      %29 = sbr.rel (0) target = $region21
    $region20: #{tpu_custom_call.1} parent=1 // pred_region
      %30 = dma.done [#allocation3], 1152
    $region21: #{tpu_custom_call.1} parent=1 // pred_fallthru
      _
    %v31 = vld [vmem:[#allocation2] sm:$0xff]
    %v32 = vld [vmem:[#allocation2 + $0x8] sm:$0xff]
    %v33 = vld [vmem:[#allocation2 + $0x10] sm:$0xff]
    %s34 = scalar_lea.vmem [#allocation2], 24
    %v35 = vld [vmem:[%s34] sm:$0xff]
    %v36 = vld [vmem:[%s34 + $0x8] sm:$0xff]
    %v37 = vld [vmem:[%s34 + $0x10] sm:$0xff]
    %s38 = scalar_lea.vmem [#allocation2], 48
    %v39 = vld [vmem:[%s38] sm:$0xff]
    %v40 = vld [vmem:[%s38 + $0x8] sm:$0xff]
    %v41 = vld [vmem:[%s38 + $0x10] sm:$0xff]
    %v42 = vld [vmem:[%s2] sm:$0x1f]
    %s43 = scalar_lea.vmem %s2, 8
    %v44 = vld [vmem:[%s43] sm:$0x1f]
    %s45 = scalar_lea.vmem %s2, 16
    %v46 = vld [vmem:[%s45] sm:$0x1f]
    %v47 = vld [vmem:[%s3] sm:$0x1]
    %v48 = vld [vmem:[%s0] sm:$0xff]
    %v49 = vld [vmem:[%s0 + $0x8] sm:$0x1]
    %vm50 = vcmask 195584
    %v52 = vsel %vm50, %v48, 0
    %v55 = vsel %vm50, %v49, 0
    %57 = vmatprep.subr.mxu0 0.0
    %58 = vmatpush1.msra.mxu0 0.0
    %59 = vmatprep.subr.mxu0 0.0
    %60 = vmatpush1.msra.mxu0 0.0
    %61 = vmatprep.subr.mxu0 0.0
    %62 = vmatpush1.msra.mxu0 0.0
    %63 = vmatprep.subr.mxu0 0.0
    %64 = vmatpush1.msra.mxu0 0.0
    %65 = vmatprep.subr.mxu0 0.0
    %66 = vmatpush1.msra.mxu0 0.0
    %67 = vmatprep.subr.mxu0 0.0
    %68 = vmatpush1.msra.mxu0 0.0
    %69 = vmatprep.subr.mxu0 0.0
    %70 = vmatpush1.msra.mxu0 0.0
    %71 = vmatprep.subr.mxu0 0.0
    %72 = vmatpush1.msra.mxu0 0.0
    %73 = vmatprep.subr.mxu0 0.0
    %74 = vmatpush1.msra.mxu0 0.0
    %75 = vmatprep.subr.mxu0 0.0
    %76 = vmatpush1.msra.mxu0 0.0
    %77 = vmatprep.subr.mxu0 0.0
    %78 = vmatpush1.msra.mxu0 0.0
    %79 = vmatprep.subr.mxu0 0.0
    %80 = vmatpush1.msra.mxu0 0.0
    %81 = vmatprep.subr.mxu0 0.0
    %82 = vmatpush1.msra.mxu0 0.0
    %83 = vmatprep.subr.mxu0 0.0
    %84 = vmatpush1.msra.mxu0 %v33
    %85 = vmatprep.subr.mxu0 0.0
    %86 = vmatpush1.msra.mxu0 %v32
    %87 = vmatprep.subr.mxu0 0.0
    %88 = vmatpush1.msra.mxu0 %v31
    %89 = vmatprep.subr.mxu0 0.0
    %90 = vmatpush2.msra.mxu0 0.0
    %91 = vmatprep.subr.mxu0 0.0
    %92 = vmatpush2.msra.mxu0 0.0
    %93 = vmatprep.subr.mxu0 0.0
    %94 = vmatpush2.msra.mxu0 0.0
    %95 = vmatprep.subr.mxu0 0.0
    %96 = vmatpush2.msra.mxu0 0.0
    %97 = vmatprep.subr.mxu0 0.0
    %98 = vmatpush2.msra.mxu0 0.0
    %99 = vmatprep.subr.mxu0 0.0
    %100 = vmatpush2.msra.mxu0 0.0
    %101 = vmatprep.subr.mxu0 0.0
    %102 = vmatpush2.msra.mxu0 0.0
    %103 = vmatprep.subr.mxu0 0.0
    %104 = vmatpush2.msra.mxu0 0.0
    %105 = vmatprep.subr.mxu0 0.0
    %106 = vmatpush2.msra.mxu0 0.0
    %107 = vmatprep.subr.mxu0 0.0
    %108 = vmatpush2.msra.mxu0 0.0
    %109 = vmatprep.subr.mxu0 0.0
    %110 = vmatpush2.msra.mxu0 0.0
    %111 = vmatprep.subr.mxu0 0.0
    %112 = vmatpush2.msra.mxu0 0.0
    %113 = vmatprep.subr.mxu0 0.0
    %114 = vmatpush2.msra.mxu0 0.0
    %115 = vmatprep.subr.mxu0 0.0
    %116 = vmatpush2.msra.mxu0 0.0
    %117 = vmatprep.subr.mxu0 0.0
    %118 = vmatpush2.msra.mxu0 0.0
    %119 = vmatprep.subr.mxu0 0.0
    %120 = vmatpush2.msra.mxu0 0.0
    %121 = vmatprep.mubr.f32.mxu0 0.0
    %122 = vmatmul.mubr.f32.gmra.mxu0 %v52
    %v123 = vpop.f32.mrf.mxu0
    %v124 = vadd.f32 0.0, %v123
    %v125 = vpop.f32.mrf.mxu0
    %126 = vmatprep.mubr.f32.mxu0 0.0
    %127 = vmatmul.mubr.f32.gmra.mxu0 %v55
    %v128 = vpop.f32.mrf.mxu0
    %v129 = vadd.f32 0.0, %v128
    %v130 = vpop.f32.mrf.mxu0
    %131 = vdwg.mxu0
    %132 = vmatprep.subr.mxu0 0.0
    %133 = vmatpush1.msra.mxu0 0.0
    %134 = vmatprep.subr.mxu0 0.0
    %135 = vmatpush1.msra.mxu0 0.0
    %136 = vmatprep.subr.mxu0 0.0
    %137 = vmatpush1.msra.mxu0 0.0
    %138 = vmatprep.subr.mxu0 0.0
    %139 = vmatpush1.msra.mxu0 0.0
    %140 = vmatprep.subr.mxu0 0.0
    %141 = vmatpush1.msra.mxu0 0.0
    %142 = vmatprep.subr.mxu0 0.0
    %143 = vmatpush1.msra.mxu0 0.0
    %144 = vmatprep.subr.mxu0 0.0
    %145 = vmatpush1.msra.mxu0 0.0
    %146 = vmatprep.subr.mxu0 0.0
    %147 = vmatpush1.msra.mxu0 0.0
    %148 = vmatprep.subr.mxu0 0.0
    %149 = vmatpush1.msra.mxu0 0.0
    %150 = vmatprep.subr.mxu0 0.0
    %151 = vmatpush1.msra.mxu0 0.0
    %152 = vmatprep.subr.mxu0 0.0
    %153 = vmatpush1.msra.mxu0 0.0
    %154 = vmatprep.subr.mxu0 0.0
    %155 = vmatpush1.msra.mxu0 0.0
    %156 = vmatprep.subr.mxu0 0.0
    %157 = vmatpush1.msra.mxu0 0.0
    %158 = vmatprep.subr.mxu0 0.0
    %159 = vmatpush1.msra.mxu0 %v37
    %160 = vmatprep.subr.mxu0 0.0
    %161 = vmatpush1.msra.mxu0 %v36
    %162 = vmatprep.subr.mxu0 0.0
    %163 = vmatpush1.msra.mxu0 %v35
    %164 = vmatprep.subr.mxu0 0.0
    %165 = vmatpush2.msra.mxu0 0.0
    %166 = vmatprep.subr.mxu0 0.0
    %167 = vmatpush2.msra.mxu0 0.0
    %168 = vmatprep.subr.mxu0 0.0
    %169 = vmatpush2.msra.mxu0 0.0
    %170 = vmatprep.subr.mxu0 0.0
    %171 = vmatpush2.msra.mxu0 0.0
    %172 = vmatprep.subr.mxu0 0.0
    %173 = vmatpush2.msra.mxu0 0.0
    %174 = vmatprep.subr.mxu0 0.0
    %175 = vmatpush2.msra.mxu0 0.0
    %176 = vmatprep.subr.mxu0 0.0
    %177 = vmatpush2.msra.mxu0 0.0
    %178 = vmatprep.subr.mxu0 0.0
    %179 = vmatpush2.msra.mxu0 0.0
    %180 = vmatprep.subr.mxu0 0.0
    %181 = vmatpush2.msra.mxu0 0.0
    %182 = vmatprep.subr.mxu0 0.0
    %183 = vmatpush2.msra.mxu0 0.0
    %184 = vmatprep.subr.mxu0 0.0
    %185 = vmatpush2.msra.mxu0 0.0
    %186 = vmatprep.subr.mxu0 0.0
    %187 = vmatpush2.msra.mxu0 0.0
    %188 = vmatprep.subr.mxu0 0.0
    %189 = vmatpush2.msra.mxu0 0.0
    %190 = vmatprep.subr.mxu0 0.0
    %191 = vmatpush2.msra.mxu0 0.0
    %192 = vmatprep.subr.mxu0 0.0
    %193 = vmatpush2.msra.mxu0 0.0
    %194 = vmatprep.subr.mxu0 0.0
    %195 = vmatpush2.msra.mxu0 0.0
    %196 = vmatprep.mubr.f32.mxu0 0.0
    %197 = vmatmul.mubr.f32.gmra.mxu0 %v52
    %v198 = vpop.f32.mrf.mxu0
    %v199 = vadd.f32 0.0, %v198
    %v200 = vpop.f32.mrf.mxu0
    %201 = vmatprep.mubr.f32.mxu0 0.0
    %202 = vmatmul.mubr.f32.gmra.mxu0 %v55
    %v203 = vpop.f32.mrf.mxu0
    %v204 = vadd.f32 0.0, %v203
    %v205 = vpop.f32.mrf.mxu0
    %206 = vdwg.mxu0
    %vm207 = vcmask 72704
    %v209 = vsel %vm207, %v44, 0
    %vm211 = vcmask 1040384
    %v213 = vsel %vm211, %v204, 0
    %215 = vmatprep.subr.mxu0 0.0
    %216 = vmatpush1.msra.mxu0 0.0
    %217 = vmatprep.subr.mxu0 0.0
    %218 = vmatpush1.msra.mxu0 0.0
    %219 = vmatprep.subr.mxu0 0.0
    %220 = vmatpush1.msra.mxu0 0.0
    %221 = vmatprep.subr.mxu0 0.0
    %222 = vmatpush1.msra.mxu0 0.0
    %223 = vmatprep.subr.mxu0 0.0
    %224 = vmatpush1.msra.mxu0 0.0
    %225 = vmatprep.subr.mxu0 0.0
    %226 = vmatpush1.msra.mxu0 0.0
    %227 = vmatprep.subr.mxu0 0.0
    %228 = vmatpush1.msra.mxu0 0.0
    %229 = vmatprep.subr.mxu0 0.0
    %230 = vmatpush1.msra.mxu0 0.0
    %231 = vmatprep.subr.mxu0 0.0
    %232 = vmatpush1.msra.mxu0 0.0
    %233 = vmatprep.subr.mxu0 0.0
    %234 = vmatpush1.msra.mxu0 0.0
    %235 = vmatprep.subr.mxu0 0.0
    %236 = vmatpush1.msra.mxu0 0.0
    %237 = vmatprep.subr.mxu0 0.0
    %238 = vmatpush1.msra.mxu0 0.0
    %239 = vmatprep.subr.mxu0 0.0
    %240 = vmatpush1.msra.mxu0 0.0
    %241 = vmatprep.subr.mxu0 0.0
    %242 = vmatpush1.msra.mxu0 0.0
    %243 = vmatprep.subr.mxu0 0.0
    %244 = vmatpush1.msra.mxu0 %v213
    %245 = vmatprep.subr.mxu0 0.0
    %246 = vmatpush1.msra.mxu0 %v199
    %247 = vmatprep.subr.mxu0 0.0
    %248 = vmatpush2.msra.mxu0 0.0
    %249 = vmatprep.subr.mxu0 0.0
    %250 = vmatpush2.msra.mxu0 0.0
    %251 = vmatprep.subr.mxu0 0.0
    %252 = vmatpush2.msra.mxu0 0.0
    %253 = vmatprep.subr.mxu0 0.0
    %254 = vmatpush2.msra.mxu0 0.0
    %255 = vmatprep.subr.mxu0 0.0
    %256 = vmatpush2.msra.mxu0 0.0
    %257 = vmatprep.subr.mxu0 0.0
    %258 = vmatpush2.msra.mxu0 0.0
    %259 = vmatprep.subr.mxu0 0.0
    %260 = vmatpush2.msra.mxu0 0.0
    %261 = vmatprep.subr.mxu0 0.0
    %262 = vmatpush2.msra.mxu0 0.0
    %263 = vmatprep.subr.mxu0 0.0
    %264 = vmatpush2.msra.mxu0 0.0
    %265 = vmatprep.subr.mxu0 0.0
    %266 = vmatpush2.msra.mxu0 0.0
    %267 = vmatprep.subr.mxu0 0.0
    %268 = vmatpush2.msra.mxu0 0.0
    %269 = vmatprep.subr.mxu0 0.0
    %270 = vmatpush2.msra.mxu0 0.0
    %271 = vmatprep.subr.mxu0 0.0
    %272 = vmatpush2.msra.mxu0 0.0
    %273 = vmatprep.subr.mxu0 0.0
    %274 = vmatpush2.msra.mxu0 0.0
    %275 = vmatprep.subr.mxu0 0.0
    %276 = vmatpush2.msra.mxu0 0.0
    %277 = vmatprep.subr.mxu0 0.0
    %278 = vmatpush2.msra.mxu0 0.0
    %279 = vmatprep.mubr.f32.mxu0 0.0
    %280 = vmatmul.mubr.f32.gmra.mxu0 %v209
    %v281 = vpop.f32.mrf.mxu0
    %v282 = vadd.f32 0.0, %v281
    %v283 = vpop.f32.mrf.mxu0
    %284 = vdwg.mxu0
    %v286 = vsel %vm207, %v42, 0
    %v289 = vsel %vm211, %v129, 0
    %291 = vmatprep.subr.mxu0 0.0
    %292 = vmatpush1.msra.mxu0 0.0
    %293 = vmatprep.subr.mxu0 0.0
    %294 = vmatpush1.msra.mxu0 0.0
    %295 = vmatprep.subr.mxu0 0.0
    %296 = vmatpush1.msra.mxu0 0.0
    %297 = vmatprep.subr.mxu0 0.0
    %298 = vmatpush1.msra.mxu0 0.0
    %299 = vmatprep.subr.mxu0 0.0
    %300 = vmatpush1.msra.mxu0 0.0
    %301 = vmatprep.subr.mxu0 0.0
    %302 = vmatpush1.msra.mxu0 0.0
    %303 = vmatprep.subr.mxu0 0.0
    %304 = vmatpush1.msra.mxu0 0.0
    %305 = vmatprep.subr.mxu0 0.0
    %306 = vmatpush1.msra.mxu0 0.0
    %307 = vmatprep.subr.mxu0 0.0
    %308 = vmatpush1.msra.mxu0 0.0
    %309 = vmatprep.subr.mxu0 0.0
    %310 = vmatpush1.msra.mxu0 0.0
    %311 = vmatprep.subr.mxu0 0.0
    %312 = vmatpush1.msra.mxu0 0.0
    %313 = vmatprep.subr.mxu0 0.0
    %314 = vmatpush1.msra.mxu0 0.0
    %315 = vmatprep.subr.mxu0 0.0
    %316 = vmatpush1.msra.mxu0 0.0
    %317 = vmatprep.subr.mxu0 0.0
    %318 = vmatpush1.msra.mxu0 0.0
    %319 = vmatprep.subr.mxu0 0.0
    %320 = vmatpush1.msra.mxu0 %v289
    %321 = vmatprep.subr.mxu0 0.0
    %322 = vmatpush1.msra.mxu0 %v124
    %323 = vmatprep.subr.mxu0 0.0
    %324 = vmatpush2.msra.mxu0 0.0
    %325 = vmatprep.subr.mxu0 0.0
    %326 = vmatpush2.msra.mxu0 0.0
    %327 = vmatprep.subr.mxu0 0.0
    %328 = vmatpush2.msra.mxu0 0.0
    %329 = vmatprep.subr.mxu0 0.0
    %330 = vmatpush2.msra.mxu0 0.0
    %331 = vmatprep.subr.mxu0 0.0
    %332 = vmatpush2.msra.mxu0 0.0
    %333 = vmatprep.subr.mxu0 0.0
    %334 = vmatpush2.msra.mxu0 0.0
    %335 = vmatprep.subr.mxu0 0.0
    %336 = vmatpush2.msra.mxu0 0.0
    %337 = vmatprep.subr.mxu0 0.0
    %338 = vmatpush2.msra.mxu0 0.0
    %339 = vmatprep.subr.mxu0 0.0
    %340 = vmatpush2.msra.mxu0 0.0
    %341 = vmatprep.subr.mxu0 0.0
    %342 = vmatpush2.msra.mxu0 0.0
    %343 = vmatprep.subr.mxu0 0.0
    %344 = vmatpush2.msra.mxu0 0.0
    %345 = vmatprep.subr.mxu0 0.0
    %346 = vmatpush2.msra.mxu0 0.0
    %347 = vmatprep.subr.mxu0 0.0
    %348 = vmatpush2.msra.mxu0 0.0
    %349 = vmatprep.subr.mxu0 0.0
    %350 = vmatpush2.msra.mxu0 0.0
    %351 = vmatprep.subr.mxu0 0.0
    %352 = vmatpush2.msra.mxu0 0.0
    %353 = vmatprep.subr.mxu0 0.0
    %354 = vmatpush2.msra.mxu0 0.0
    %355 = vmatprep.mubr.f32.mxu0 0.0
    %356 = vmatmul.mubr.f32.gmra.mxu0 %v286
    %v357 = vpop.f32.mrf.mxu0
    %v358 = vadd.f32 %v282, %v357
    %v359 = vpop.f32.mrf.mxu0
    %360 = vdwg.mxu0
    %361 = vmatprep.subr.mxu0 0.0
    %362 = vmatpush1.msra.mxu0 0.0
    %363 = vmatprep.subr.mxu0 0.0
    %364 = vmatpush1.msra.mxu0 0.0
    %365 = vmatprep.subr.mxu0 0.0
    %366 = vmatpush1.msra.mxu0 0.0
    %367 = vmatprep.subr.mxu0 0.0
    %368 = vmatpush1.msra.mxu0 0.0
    %369 = vmatprep.subr.mxu0 0.0
    %370 = vmatpush1.msra.mxu0 0.0
    %371 = vmatprep.subr.mxu0 0.0
    %372 = vmatpush1.msra.mxu0 0.0
    %373 = vmatprep.subr.mxu0 0.0
    %374 = vmatpush1.msra.mxu0 0.0
    %375 = vmatprep.subr.mxu0 0.0
    %376 = vmatpush1.msra.mxu0 0.0
    %377 = vmatprep.subr.mxu0 0.0
    %378 = vmatpush1.msra.mxu0 0.0
    %379 = vmatprep.subr.mxu0 0.0
    %380 = vmatpush1.msra.mxu0 0.0
    %381 = vmatprep.subr.mxu0 0.0
    %382 = vmatpush1.msra.mxu0 0.0
    %383 = vmatprep.subr.mxu0 0.0
    %384 = vmatpush1.msra.mxu0 0.0
    %385 = vmatprep.subr.mxu0 0.0
    %386 = vmatpush1.msra.mxu0 0.0
    %387 = vmatprep.subr.mxu0 0.0
    %388 = vmatpush1.msra.mxu0 %v41
    %389 = vmatprep.subr.mxu0 0.0
    %390 = vmatpush1.msra.mxu0 %v40
    %391 = vmatprep.subr.mxu0 0.0
    %392 = vmatpush1.msra.mxu0 %v39
    %393 = vmatprep.subr.mxu0 0.0
    %394 = vmatpush2.msra.mxu0 0.0
    %395 = vmatprep.subr.mxu0 0.0
    %396 = vmatpush2.msra.mxu0 0.0
    %397 = vmatprep.subr.mxu0 0.0
    %398 = vmatpush2.msra.mxu0 0.0
    %399 = vmatprep.subr.mxu0 0.0
    %400 = vmatpush2.msra.mxu0 0.0
    %401 = vmatprep.subr.mxu0 0.0
    %402 = vmatpush2.msra.mxu0 0.0
    %403 = vmatprep.subr.mxu0 0.0
    %404 = vmatpush2.msra.mxu0 0.0
    %405 = vmatprep.subr.mxu0 0.0
    %406 = vmatpush2.msra.mxu0 0.0
    %407 = vmatprep.subr.mxu0 0.0
    %408 = vmatpush2.msra.mxu0 0.0
    %409 = vmatprep.subr.mxu0 0.0
    %410 = vmatpush2.msra.mxu0 0.0
    %411 = vmatprep.subr.mxu0 0.0
    %412 = vmatpush2.msra.mxu0 0.0
    %413 = vmatprep.subr.mxu0 0.0
    %414 = vmatpush2.msra.mxu0 0.0
    %415 = vmatprep.subr.mxu0 0.0
    %416 = vmatpush2.msra.mxu0 0.0
    %417 = vmatprep.subr.mxu0 0.0
    %418 = vmatpush2.msra.mxu0 0.0
    %419 = vmatprep.subr.mxu0 0.0
    %420 = vmatpush2.msra.mxu0 0.0
    %421 = vmatprep.subr.mxu0 0.0
    %422 = vmatpush2.msra.mxu0 0.0
    %423 = vmatprep.subr.mxu0 0.0
    %424 = vmatpush2.msra.mxu0 0.0
    %425 = vmatprep.mubr.f32.mxu0 0.0
    %426 = vmatmul.mubr.f32.gmra.mxu0 %v52
    %v427 = vpop.f32.mrf.mxu0
    %v428 = vadd.f32 0.0, %v427
    %v429 = vpop.f32.mrf.mxu0
    %430 = vmatprep.mubr.f32.mxu0 0.0
    %431 = vmatmul.mubr.f32.gmra.mxu0 %v55
    %v432 = vpop.f32.mrf.mxu0
    %v433 = vadd.f32 0.0, %v432
    %v434 = vpop.f32.mrf.mxu0
    %435 = vdwg.mxu0
    %v437 = vsel %vm207, %v46, 0
    %v440 = vsel %vm211, %v433, 0
    %442 = vmatprep.subr.mxu0 0.0
    %443 = vmatpush1.msra.mxu0 0.0
    %444 = vmatprep.subr.mxu0 0.0
    %445 = vmatpush1.msra.mxu0 0.0
    %446 = vmatprep.subr.mxu0 0.0
    %447 = vmatpush1.msra.mxu0 0.0
    %448 = vmatprep.subr.mxu0 0.0
    %449 = vmatpush1.msra.mxu0 0.0
    %450 = vmatprep.subr.mxu0 0.0
    %451 = vmatpush1.msra.mxu0 0.0
    %452 = vmatprep.subr.mxu0 0.0
    %453 = vmatpush1.msra.mxu0 0.0
    %454 = vmatprep.subr.mxu0 0.0
    %455 = vmatpush1.msra.mxu0 0.0
    %456 = vmatprep.subr.mxu0 0.0
    %457 = vmatpush1.msra.mxu0 0.0
    %458 = vmatprep.subr.mxu0 0.0
    %459 = vmatpush1.msra.mxu0 0.0
    %460 = vmatprep.subr.mxu0 0.0
    %461 = vmatpush1.msra.mxu0 0.0
    %462 = vmatprep.subr.mxu0 0.0
    %463 = vmatpush1.msra.mxu0 0.0
    %464 = vmatprep.subr.mxu0 0.0
    %465 = vmatpush1.msra.mxu0 0.0
    %466 = vmatprep.subr.mxu0 0.0
    %467 = vmatpush1.msra.mxu0 0.0
    %468 = vmatprep.subr.mxu0 0.0
    %469 = vmatpush1.msra.mxu0 0.0
    %470 = vmatprep.subr.mxu0 0.0
    %471 = vmatpush1.msra.mxu0 %v440
    %472 = vmatprep.subr.mxu0 0.0
    %473 = vmatpush1.msra.mxu0 %v428
    %474 = vmatprep.subr.mxu0 0.0
    %475 = vmatpush2.msra.mxu0 0.0
    %476 = vmatprep.subr.mxu0 0.0
    %477 = vmatpush2.msra.mxu0 0.0
    %478 = vmatprep.subr.mxu0 0.0
    %479 = vmatpush2.msra.mxu0 0.0
    %480 = vmatprep.subr.mxu0 0.0
    %481 = vmatpush2.msra.mxu0 0.0
    %482 = vmatprep.subr.mxu0 0.0
    %483 = vmatpush2.msra.mxu0 0.0
    %484 = vmatprep.subr.mxu0 0.0
    %485 = vmatpush2.msra.mxu0 0.0
    %486 = vmatprep.subr.mxu0 0.0
    %487 = vmatpush2.msra.mxu0 0.0
    %488 = vmatprep.subr.mxu0 0.0
    %489 = vmatpush2.msra.mxu0 0.0
    %490 = vmatprep.subr.mxu0 0.0
    %491 = vmatpush2.msra.mxu0 0.0
    %492 = vmatprep.subr.mxu0 0.0
    %493 = vmatpush2.msra.mxu0 0.0
    %494 = vmatprep.subr.mxu0 0.0
    %495 = vmatpush2.msra.mxu0 0.0
    %496 = vmatprep.subr.mxu0 0.0
    %497 = vmatpush2.msra.mxu0 0.0
    %498 = vmatprep.subr.mxu0 0.0
    %499 = vmatpush2.msra.mxu0 0.0
    %500 = vmatprep.subr.mxu0 0.0
    %501 = vmatpush2.msra.mxu0 0.0
    %502 = vmatprep.subr.mxu0 0.0
    %503 = vmatpush2.msra.mxu0 0.0
    %504 = vmatprep.subr.mxu0 0.0
    %505 = vmatpush2.msra.mxu0 0.0
    %506 = vmatprep.mubr.f32.mxu0 0.0
    %507 = vmatmul.mubr.f32.gmra.mxu0 %v437
    %v508 = vpop.f32.mrf.mxu0
    %v509 = vadd.f32 0.0, %v508
    %v510 = vpop.f32.mrf.mxu0
    %511 = vdwg.mxu0
    %v512 = vadd.f32 %v358, %v509
    %v514 = vlaneseq
    %v515 = vshrl.u32 %v514, 7
    %v516 = vsub.s32 0, %v515
    %v517 = vrot.slane %v47, %v516
    %v519 = vadd.f32 %v512, %v517
    %vm520 = vcmask 389120
    %521 = vst.msk [vmem:[%s4] sm:$0x1f] %vm520, %v519
    // Predicated region
    $region22: #{tpu_custom_call.1} parent=1 // pred_check
      _
    $region23: #{tpu_custom_call.1} parent=1 // pred_check_branch
      %523 = sbr.rel (0) target = $region25
    $region24: #{tpu_custom_call.1} parent=1 // pred_region
      _
    $region25: #{tpu_custom_call.1} parent=1 // pred_fallthru
      _
    // Predicated region
    $region26: #{tpu_custom_call.1} parent=1 // pred_check
      _
    $region27: #{tpu_custom_call.1} parent=1 // pred_check_branch
      %525 = sbr.rel (0) target = $region29
    $region28: #{tpu_custom_call.1} parent=1 // pred_region
      _
    $region29: #{tpu_custom_call.1} parent=1 // pred_fallthru
      _
    %526 = vsyncpa [#allocation3], 1

</llo_original>
